<compile_context>
chip_gen: v5e
topology: v5e:2x2
jax: 0.10.0
libtpu: 0.0.40
codegen_flags: <defaults>
</compile_context>

<pallas_src>
import jax
import jax.numpy as jnp
from jax import lax
from jax.experimental import pallas as pl
from jax.experimental.pallas import tpu as pltpu

TEMP = 0.05
EPS_LOG = 1e-6
NEG_BIG = -1e30


def _round_up(x, m):
    return (x + m - 1) // m * m


def _vmem_capacity_bytes():
    try:
        cap = getattr(pltpu.get_tpu_info(), "vmem_capacity_bytes", None)
        if cap:
            return int(cap)
    except Exception:
        pass
    return 64 * 1024 * 1024  # conservative fallback (v7x per-TC VMEM)


def _make_kernel(B, N, b_tile, n_tile):
    """B, N are the *unpadded* sizes (static); tile padding is handled via masks."""

    def kernel(q_ref, t_ref, qlab_ref, tlab_ref, out_ref,
               m_scr, s_scr, acc_scr, cnt_scr, cache_scr):
        i = pl.program_id(0)          # B tile
        p = pl.program_id(1)          # phase: 0 = matmul + max/neg-sum, 1 = positive log-probs
        n_idx = pl.program_id(2)      # N tile
        n_last = pl.num_programs(2) - 1

        # Shared masks (cheap): valid = real (non-padded) target columns.
        col_g = lax.broadcasted_iota(jnp.int32, (b_tile, n_tile), 1) + n_idx * n_tile
        valid = col_g < N
        label_eq = qlab_ref[...] == tlab_ref[...]        # [b,1] vs [1,n] -> [b,n] (bool)

        @pl.when(jnp.logical_and(p == 0, n_idx == 0))
        def _init():
            m_scr[...] = jnp.full_like(m_scr, NEG_BIG)
            s_scr[...] = jnp.zeros_like(s_scr)
            acc_scr[...] = jnp.zeros_like(acc_scr)
            cnt_scr[...] = jnp.zeros_like(cnt_scr)

        @pl.when(p == 0)
        def _pass_max_negsum():
            # Operands are pre-normalized in the wrapper; 1/temp is folded into the query rows,
            # so this dot_general directly produces temperature-scaled cosine logits (f32 acc).
            logits = lax.dot_general(
                q_ref[...], t_ref[...],
                dimension_numbers=(((1,), (1,)), ((), ())),
                preferred_element_type=jnp.float32)       # [b_tile, n_tile]
            cache_scr[n_idx] = logits                     # cache for phase 1 (no recompute)

            logits_v = jnp.where(valid, logits, NEG_BIG)  # padded columns never win the max
            m_prev = m_scr[...]
            m_new = jnp.maximum(m_prev, jnp.max(logits_v, axis=-1, keepdims=True))
            alpha = jnp.exp(m_prev - m_new)
            e = jnp.exp(logits_v - m_new)                 # padded columns underflow to 0
            # The keys-block diagonal always has label_eq (target labels[:B] == query labels),
            # so `valid & ~label_eq` already excludes it -> no iota/diag work in this phase.
            neg = jnp.logical_and(valid, jnp.logical_not(label_eq))
            s_scr[...] = alpha * s_scr[...] + jnp.sum(
                jnp.where(neg, e, 0.0), axis=-1, keepdims=True)
            m_scr[...] = m_new

        @pl.when(p == 1)
        def _pass_positives():
            logits = cache_scr[n_idx]                     # read back cached logits (VMEM only)
            row_g = lax.broadcasted_iota(jnp.int32, (b_tile, n_tile), 0) + i * b_tile
            diag = jnp.logical_and(row_g == col_g, col_g < B)   # keys-block diagonal
            pos = jnp.logical_and(
                jnp.logical_and(label_eq, jnp.logical_not(diag)), valid)
            l = logits - m_scr[...]                       # final row max
            denom = jnp.exp(l) + (s_scr[...] + EPS_LOG)   # exp(l_pos) + neg_sum + eps
            term = jnp.where(pos, l - jnp.log(denom), 0.0)
            acc_scr[...] += jnp.sum(term, axis=-1, keepdims=True)
            cnt_scr[...] += jnp.sum(jnp.where(pos, 1.0, 0.0), axis=-1, keepdims=True)

        @pl.when(jnp.logical_and(p == 1, n_idx == n_last))
        def _finalize():
            row_log_prob = acc_scr[...] / jnp.maximum(cnt_scr[...], 1.0)   # [b_tile, 1]
            out_ref[...] = jnp.broadcast_to(row_log_prob, out_ref.shape)   # lane-dense write

    return kernel


def sup_infonce(query, keys, queue, query_labels, queue_labels,
                *, temp=TEMP, b_tile=256, n_tile=None, operand_dtype=jnp.bfloat16):
    """query/keys: [B, D]; queue: [Q, D]; labels: int arrays [B] / [Q]. Returns scalar loss."""
    B, D = query.shape
    Q = queue.shape[0]
    N = B + Q

    # --- hoisted L2 normalization (cosine) + 1/temp fold, once, in f32 ---
    q32 = query.astype(jnp.float32)
    t32 = jnp.concatenate([keys, queue], axis=0).astype(jnp.float32)
    q_hat = q32 * (lax.rsqrt(jnp.sum(q32 * q32, axis=-1, keepdims=True) + 1e-16) * (1.0 / temp))
    t_hat = t32 * lax.rsqrt(jnp.sum(t32 * t32, axis=-1, keepdims=True) + 1e-16)

    qlab = query_labels.astype(jnp.int32)
    tlab = jnp.concatenate([query_labels, queue_labels]).astype(jnp.int32)

    # --- tile sizes / padding (lane-dense, (8,128)-aligned) ---
    dt_bytes = jnp.dtype(operand_dtype).itemsize
    D_pad = _round_up(D, 128)
    if n_tile is None:
        n_tile = 2048 if dt_bytes <= 2 else 1024
    n_tile = min(n_tile, _round_up(N, 128))
    N_pad = _round_up(N, n_tile)
    n_tiles = N_pad // n_tile

    cap = _vmem_capacity_bytes()
    b_tile = max(8, _round_up(min(b_tile, _round_up(B, 8)), 8))
    # Keep the per-B-tile f32 logits cache within budget (v7x has only 64 MiB VMEM).
    cache_cap = min(24 << 20, cap // 4)
    while b_tile > 8 and b_tile * N_pad * 4 > cache_cap:
        b_tile = max(8, (b_tile // 2) // 8 * 8)
    # Keep >=2 B tiles so the "parallel" B axis can split across TensorCores (v7x megacore).
    # (On 1-TC chips this only costs a second, small, target stream when B <= b_tile.)
    if B > 8 and _round_up(B, b_tile) // b_tile < 2:
        b_tile = _round_up((B + 1) // 2, 8)
    B_pad = _round_up(B, b_tile)

    # --- VMEM budget (per generation) instead of a hard-coded limit ---
    footprint = (2 * b_tile * D_pad * dt_bytes        # query tile (resident, + buffer slack)
                 + 3 * n_tile * D_pad * dt_bytes      # double-buffered target tiles (+ slack)
                 + n_tiles * b_tile * n_tile * 4      # f32 logits cache
                 + 2 * b_tile * 128 * 4               # lane-dense output block
                 + 4 * (b_tile + n_tile) * 4          # label tiles
                 + 4 * b_tile * 4)                    # m/s/acc/cnt scratch
    vmem_limit = min(cap * 3 // 4, max(32 << 20, footprint + (8 << 20)))
    vmem_limit = max(vmem_limit, footprint + (2 << 20))

    sentinel = jnp.iinfo(jnp.int32).min  # padded rows/cols are masked in-kernel anyway

    q_p = jnp.zeros((B_pad, D_pad), operand_dtype).at[:B, :D].set(q_hat.astype(operand_dtype))
    t_p = jnp.zeros((N_pad, D_pad), operand_dtype).at[:N, :D].set(t_hat.astype(operand_dtype))
    qlab_p = jnp.full((B_pad, 1), sentinel, jnp.int32).at[:B, 0].set(qlab)
    tlab_p = jnp.full((1, N_pad), sentinel, jnp.int32).at[0, :N].set(tlab)

    grid = (B_pad // b_tile, 2, n_tiles)
    kernel = _make_kernel(B=B, N=N, b_tile=b_tile, n_tile=n_tile)

    # Phase 1 reads only the VMEM logits cache; pin its target block index to the last
    # phase-0 block so the pipeline issues no target DMAs during phase 1.
    t_index = lambda i, p, n: (n * (1 - p) + (n_tiles - 1) * p, 0)

    out = pl.pallas_call(
        kernel,
        out_shape=jax.ShapeDtypeStruct((B_pad, 128), jnp.float32),
        grid_spec=pltpu.PrefetchScalarGridSpec(
            num_scalar_prefetch=0,
            grid=grid,
            in_specs=[
                pl.BlockSpec((b_tile, D_pad), lambda i, p, n: (i, 0)),   # query tile (resident)
                pl.BlockSpec((n_tile, D_pad), t_index),                  # target tile (phase 0 only)
                pl.BlockSpec((b_tile, 1), lambda i, p, n: (i, 0)),       # query labels
                pl.BlockSpec((1, n_tile), lambda i, p, n: (0, n)),       # target labels (tiny)
            ],
            out_specs=pl.BlockSpec((b_tile, 128), lambda i, p, n: (i, 0)),
            scratch_shapes=[
                pltpu.VMEM((b_tile, 1), jnp.float32),                    # m (running max)
                pltpu.VMEM((b_tile, 1), jnp.float32),                    # s (neg exp-sum)
                pltpu.VMEM((b_tile, 1), jnp.float32),                    # acc (sum log-probs)
                pltpu.VMEM((b_tile, 1), jnp.float32),                    # cnt (positive count)
                pltpu.VMEM((n_tiles, b_tile, n_tile), jnp.float32),      # cached logits
            ],
        ),
        compiler_params=pltpu.CompilerParams(
            dimension_semantics=("parallel", "arbitrary", "arbitrary"),
            vmem_limit_bytes=int(vmem_limit),
        ),
    )(q_p, t_p, qlab_p, tlab_p)

    # Final reduction (tiny) in plain JAX; padded rows dropped.
    return -jnp.mean(out[:B, 0])


def _reference(query, keys, queue, query_labels, queue_labels, temp=TEMP):
    # Pure-JAX mirror of the PyTorch forward, for verification.
    B = query.shape[0]
    targets = jnp.concatenate([keys, queue], axis=0)
    qn = jnp.linalg.norm(query, axis=-1, keepdims=True)
    tn = jnp.linalg.norm(targets, axis=-1, keepdims=True)
    sim = (query @ targets.T) / jnp.maximum(qn * tn.T, 1e-8)
    logits = sim / temp
    logits = logits - jnp.max(logits, axis=1, keepdims=True)
    N = targets.shape[0]
    inv_diag = jnp.concatenate(
        [~jnp.eye(B, dtype=bool), jnp.ones((B, N - B), dtype=bool)], axis=1)
    tlab = jnp.concatenate([query_labels, queue_labels])
    pos = (query_labels[:, None] == tlab[None, :]) & inv_diag
    uni = jnp.exp(logits) * inv_diag
    uni = uni * pos + jnp.sum(uni * (~pos) * inv_diag, axis=1, keepdims=True)
    uni = jnp.log(uni + EPS_LOG)
    lp = logits - uni
    cnt = jnp.sum(pos, axis=1, keepdims=True)
    lp = jnp.sum(pos * lp, axis=1, keepdims=True) / jnp.maximum(cnt, 1)
    return -jnp.mean(lp)


if __name__ == "__main__":
    # Small but multi-tile: B=16 (2 B-tiles of 8), N=256 (2 N-tiles of 128), D=32 (padded to 128).
    B, Q, D = 16, 240, 32
    key = jax.random.PRNGKey(0)
    k1, k2, k3, k4, k5 = jax.random.split(key, 5)
    query = jax.random.normal(k1, (B, D), dtype=jnp.float32)
    keys = jax.random.normal(k2, (B, D), dtype=jnp.float32)
    queue = jax.random.normal(k3, (Q, D), dtype=jnp.float32)
    query_labels = jax.random.randint(k4, (B,), 0, 3, dtype=jnp.int32)
    queue_labels = jax.random.randint(k5, (Q,), 0, 3, dtype=jnp.int32)

    ref = _reference(query, keys, queue, query_labels, queue_labels)

    # f32 operand path, forced multi-tile: tight check.
    loss_f32 = sup_infonce(query, keys, queue, query_labels, queue_labels,
                           b_tile=8, n_tile=128, operand_dtype=jnp.float32)
    jax.block_until_ready(loss_f32)
    assert jnp.allclose(loss_f32, ref, atol=2e-3, rtol=2e-3), (loss_f32, ref)

    # Default bf16 operand path (halved HBM stream, native MXU), multi-tile: loose check.
    loss_bf16 = sup_infonce(query, keys, queue, query_labels, queue_labels,
                            b_tile=8, n_tile=128)
    jax.block_until_ready(loss_bf16)
    assert abs(float(loss_bf16) - float(ref)) < 0.05 * abs(float(ref)) + 0.05, (loss_bf16, ref)

    # Default auto-tiling (single N tile path) for coverage.
    loss_auto = sup_infonce(query, keys, queue, query_labels, queue_labels)
    jax.block_until_ready(loss_auto)
    assert abs(float(loss_auto) - float(ref)) < 0.05 * abs(float(ref)) + 0.05, (loss_auto, ref)

    print("KERNEL_OK")
</pallas_src>

<mosaic_0001>
module attributes {stable_mosaic.version = 11 : i64} {
  func.func @kernel(%arg0: i32, %arg1: i32, %arg2: i32, %arg3: memref<8x128xf32, #tpu.memory_space<vmem>>, %arg4: memref<128x128xf32, #tpu.memory_space<vmem>>, %arg5: memref<8x1xi32, #tpu.memory_space<vmem>>, %arg6: memref<1x128xi32, #tpu.memory_space<vmem>>, %arg7: memref<8x128xf32, #tpu.memory_space<vmem>>, %arg8: memref<8x1xf32, #tpu.memory_space<vmem>>, %arg9: memref<8x1xf32, #tpu.memory_space<vmem>>, %arg10: memref<8x1xf32, #tpu.memory_space<vmem>>, %arg11: memref<8x1xf32, #tpu.memory_space<vmem>>, %arg12: memref<2x8x128xf32, #tpu.memory_space<vmem>>) attributes {dimension_semantics = [#tpu.dimension_semantics<parallel>, #tpu.dimension_semantics<arbitrary>, #tpu.dimension_semantics<arbitrary>], iteration_bounds = array<i64: 2, 2, 2>, scalar_prefetch = 0 : i64, scratch_operands = 5 : i64, tpu.core_type = #tpu.core_type<tc>, window_params = [{transform_indices = @transform_0, window_bounds = array<i64: 8, 128>}, {transform_indices = @transform_1, window_bounds = array<i64: 128, 128>}, {transform_indices = @transform_2, window_bounds = array<i64: 8, 1>}, {transform_indices = @transform_3, window_bounds = array<i64: 1, 128>}, {transform_indices = @transform_4, window_bounds = array<i64: 8, 128>}]} {
    %0 = tpu.iota {dimensions = array<i32: 1>} : vector<8x128xi32>
    %c128_i32 = arith.constant 128 : i32
    %1 = arith.muli %arg2, %c128_i32 : i32
    %2 = vector.broadcast %1 : i32 to vector<8x128xi32>
    %3 = arith.addi %0, %2 : vector<8x128xi32>
    %c256_i32 = arith.constant 256 : i32
    %4 = vector.broadcast %c256_i32 : i32 to vector<8x128xi32>
    %5 = arith.cmpi slt, %3, %4 : vector<8x128xi32>
    %c0 = arith.constant 0 : index
    %c0_0 = arith.constant 0 : index
    %6 = vector.load %arg5[%c0, %c0_0] : memref<8x1xi32, #tpu.memory_space<vmem>>, vector<8x1xi32>
    %c0_1 = arith.constant 0 : index
    %c0_2 = arith.constant 0 : index
    %7 = vector.load %arg6[%c0_1, %c0_2] : memref<1x128xi32, #tpu.memory_space<vmem>>, vector<1x128xi32>
    %8 = vector.broadcast %6 : vector<8x1xi32> to vector<8x128xi32>
    %9 = vector.broadcast %7 : vector<1x128xi32> to vector<8x128xi32>
    %10 = arith.cmpi eq, %8, %9 : vector<8x128xi32>
    %c0_i32 = arith.constant 0 : i32
    %11 = arith.cmpi eq, %arg1, %c0_i32 : i32
    %c0_i32_3 = arith.constant 0 : i32
    %12 = arith.cmpi eq, %arg2, %c0_i32_3 : i32
    %13 = arith.andi %11, %12 : i1
    %14 = arith.extui %13 : i1 to i32
    %c0_i32_4 = arith.constant 0 : i32
    %15 = arith.cmpi ne, %14, %c0_i32_4 : i32
    scf.if %15 {
      %cst = arith.constant -1.000000e+30 : f32
      %27 = vector.broadcast %cst : f32 to vector<8x1xf32>
      %c0_11 = arith.constant 0 : index
      %c0_12 = arith.constant 0 : index
      %28 = vector.load %arg8[%c0_11, %c0_12] : memref<8x1xf32, #tpu.memory_space<vmem>>, vector<8x1xf32>
      tpu.vector_store %arg8[%c0_11, %c0_12], %27 {strides = array<i32>} : memref<8x1xf32, #tpu.memory_space<vmem>>, vector<8x1xf32>,
      %cst_13 = arith.constant 0.000000e+00 : f32
      %29 = vector.broadcast %cst_13 : f32 to vector<8x1xf32>
      %c0_14 = arith.constant 0 : index
      %c0_15 = arith.constant 0 : index
      %30 = vector.load %arg9[%c0_14, %c0_15] : memref<8x1xf32, #tpu.memory_space<vmem>>, vector<8x1xf32>
      tpu.vector_store %arg9[%c0_14, %c0_15], %29 {strides = array<i32>} : memref<8x1xf32, #tpu.memory_space<vmem>>, vector<8x1xf32>,
      %cst_16 = arith.constant 0.000000e+00 : f32
      %31 = vector.broadcast %cst_16 : f32 to vector<8x1xf32>
      %c0_17 = arith.constant 0 : index
      %c0_18 = arith.constant 0 : index
      %32 = vector.load %arg10[%c0_17, %c0_18] : memref<8x1xf32, #tpu.memory_space<vmem>>, vector<8x1xf32>
      tpu.vector_store %arg10[%c0_17, %c0_18], %31 {strides = array<i32>} : memref<8x1xf32, #tpu.memory_space<vmem>>, vector<8x1xf32>,
      %cst_19 = arith.constant 0.000000e+00 : f32
      %33 = vector.broadcast %cst_19 : f32 to vector<8x1xf32>
      %c0_20 = arith.constant 0 : index
      %c0_21 = arith.constant 0 : index
      %34 = vector.load %arg11[%c0_20, %c0_21] : memref<8x1xf32, #tpu.memory_space<vmem>>, vector<8x1xf32>
      tpu.vector_store %arg11[%c0_20, %c0_21], %33 {strides = array<i32>} : memref<8x1xf32, #tpu.memory_space<vmem>>, vector<8x1xf32>,
    } else {
    }
    %c0_i32_5 = arith.constant 0 : i32
    %16 = arith.cmpi eq, %arg1, %c0_i32_5 : i32
    %17 = arith.extui %16 : i1 to i32
    %c0_i32_6 = arith.constant 0 : i32
    %18 = arith.cmpi ne, %17, %c0_i32_6 : i32
    scf.if %18 {
      %c0_11 = arith.constant 0 : index
      %c0_12 = arith.constant 0 : index
      %27 = vector.load %arg3[%c0_11, %c0_12] : memref<8x128xf32, #tpu.memory_space<vmem>>, vector<8x128xf32>
      %c0_13 = arith.constant 0 : index
      %c0_14 = arith.constant 0 : index
      %28 = vector.load %arg4[%c0_13, %c0_14] : memref<128x128xf32, #tpu.memory_space<vmem>>, vector<128x128xf32>
      %cst = arith.constant dense<0.000000e+00> : vector<8x128xf32>
      %29 = tpu.matmul %27, %28, %cst {dimension_numbers = #tpu.dot_dimension_numbers<[1], [1], [0], [0], [0, 0, 1, 0], [], []>} : vector<8x128xf32>, vector<128x128xf32>, vector<8x128xf32> -> vector<8x128xf32>
      %30 = arith.index_cast %arg2 : i32 to index
      %c0_15 = arith.constant 0 : index
      %c0_16 = arith.constant 0 : index
      %31 = vector.load %arg12[%30, %c0_15, %c0_16] : memref<2x8x128xf32, #tpu.memory_space<vmem>>, vector<1x8x128xf32>
      %32 = vector.shape_cast %31 : vector<1x8x128xf32> to vector<8x128xf32>
      %33 = vector.shape_cast %29 : vector<8x128xf32> to vector<1x8x128xf32>
      tpu.vector_store %arg12[%30, %c0_15, %c0_16], %33 {strides = array<i32>} : memref<2x8x128xf32, #tpu.memory_space<vmem>>, vector<1x8x128xf32>,
      %cst_17 = arith.constant -1.000000e+30 : f32
      %34 = vector.broadcast %cst_17 : f32 to vector<8x128xf32>
      %35 = arith.select %5, %29, %34 : vector<8x128xi1>, vector<8x128xf32>
      %c0_18 = arith.constant 0 : index
      %c0_19 = arith.constant 0 : index
      %36 = vector.load %arg8[%c0_18, %c0_19] : memref<8x1xf32, #tpu.memory_space<vmem>>, vector<8x1xf32>
      %cst_20 = arith.constant dense<0xFF800000> : vector<8xf32>
      %37 = vector.multi_reduction <maximumf>, %35, %cst_20 [1] : vector<8x128xf32> to vector<8xf32>
      %38 = vector.shape_cast %37 : vector<8xf32> to vector<8x1xf32>
      %39 = arith.maximumf %36, %38 : vector<8x1xf32>
      %40 = arith.subf %36, %39 : vector<8x1xf32>
      %41 = math.exp %40 : vector<8x1xf32>
      %42 = vector.broadcast %39 : vector<8x1xf32> to vector<8x128xf32>
      %43 = arith.subf %35, %42 : vector<8x128xf32>
      %44 = math.exp %43 : vector<8x128xf32>
      %cst_21 = arith.constant dense<true> : vector<8x128xi1>
      %45 = arith.xori %10, %cst_21 : vector<8x128xi1>
      %46 = arith.andi %5, %45 : vector<8x128xi1>
      %c0_22 = arith.constant 0 : index
      %c0_23 = arith.constant 0 : index
      %47 = vector.load %arg9[%c0_22, %c0_23] : memref<8x1xf32, #tpu.memory_space<vmem>>, vector<8x1xf32>
      %48 = arith.mulf %41, %47 : vector<8x1xf32>
      %cst_24 = arith.constant 0.000000e+00 : f32
      %49 = vector.broadcast %cst_24 : f32 to vector<8x128xf32>
      %50 = arith.select %46, %44, %49 : vector<8x128xi1>, vector<8x128xf32>
      %cst_25 = arith.constant dense<0.000000e+00> : vector<8xf32>
      %51 = vector.multi_reduction <add>, %50, %cst_25 [1] : vector<8x128xf32> to vector<8xf32>
      %52 = vector.shape_cast %51 : vector<8xf32> to vector<8x1xf32>
      %53 = arith.addf %48, %52 : vector<8x1xf32>
      %c0_26 = arith.constant 0 : index
      %c0_27 = arith.constant 0 : index
      %54 = vector.load %arg9[%c0_26, %c0_27] : memref<8x1xf32, #tpu.memory_space<vmem>>, vector<8x1xf32>
      tpu.vector_store %arg9[%c0_26, %c0_27], %53 {strides = array<i32>} : memref<8x1xf32, #tpu.memory_space<vmem>>, vector<8x1xf32>,
      %c0_28 = arith.constant 0 : index
      %c0_29 = arith.constant 0 : index
      %55 = vector.load %arg8[%c0_28, %c0_29] : memref<8x1xf32, #tpu.memory_space<vmem>>, vector<8x1xf32>
      tpu.vector_store %arg8[%c0_28, %c0_29], %39 {strides = array<i32>} : memref<8x1xf32, #tpu.memory_space<vmem>>, vector<8x1xf32>,
    } else {
    }
    %c1_i32 = arith.constant 1 : i32
    %19 = arith.cmpi eq, %arg1, %c1_i32 : i32
    %20 = arith.extui %19 : i1 to i32
    %c0_i32_7 = arith.constant 0 : i32
    %21 = arith.cmpi ne, %20, %c0_i32_7 : i32
    scf.if %21 {
      %27 = arith.index_cast %arg2 : i32 to index
      %c0_11 = arith.constant 0 : index
      %c0_12 = arith.constant 0 : index
      %28 = vector.load %arg12[%27, %c0_11, %c0_12] : memref<2x8x128xf32, #tpu.memory_space<vmem>>, vector<1x8x128xf32>
      %29 = vector.shape_cast %28 : vector<1x8x128xf32> to vector<8x128xf32>
      %30 = tpu.iota {dimensions = array<i32: 0>} : vector<8x128xi32>
      %c8_i32 = arith.constant 8 : i32
      %31 = arith.muli %arg0, %c8_i32 : i32
      %32 = vector.broadcast %31 : i32 to vector<8x128xi32>
      %33 = arith.addi %30, %32 : vector<8x128xi32>
      %34 = arith.cmpi eq, %33, %3 : vector<8x128xi32>
      %c16_i32 = arith.constant 16 : i32
      %35 = vector.broadcast %c16_i32 : i32 to vector<8x128xi32>
      %36 = arith.cmpi slt, %3, %35 : vector<8x128xi32>
      %37 = arith.andi %34, %36 : vector<8x128xi1>
      %cst = arith.constant dense<true> : vector<8x128xi1>
      %38 = arith.xori %37, %cst : vector<8x128xi1>
      %39 = arith.andi %10, %38 : vector<8x128xi1>
      %40 = arith.andi %39, %5 : vector<8x128xi1>
      %c0_13 = arith.constant 0 : index
      %c0_14 = arith.constant 0 : index
      %41 = vector.load %arg8[%c0_13, %c0_14] : memref<8x1xf32, #tpu.memory_space<vmem>>, vector<8x1xf32>
      %42 = vector.broadcast %41 : vector<8x1xf32> to vector<8x128xf32>
      %43 = arith.subf %29, %42 : vector<8x128xf32>
      %44 = math.exp %43 : vector<8x128xf32>
      %c0_15 = arith.constant 0 : index
      %c0_16 = arith.constant 0 : index
      %45 = vector.load %arg9[%c0_15, %c0_16] : memref<8x1xf32, #tpu.memory_space<vmem>>, vector<8x1xf32>
      %cst_17 = arith.constant 9.99999997E-7 : f32
      %46 = vector.broadcast %cst_17 : f32 to vector<8x1xf32>
      %47 = arith.addf %45, %46 : vector<8x1xf32>
      %48 = vector.broadcast %47 : vector<8x1xf32> to vector<8x128xf32>
      %49 = arith.addf %44, %48 : vector<8x128xf32>
      %50 = math.log %49 : vector<8x128xf32>
      %51 = arith.subf %43, %50 : vector<8x128xf32>
      %cst_18 = arith.constant 0.000000e+00 : f32
      %52 = vector.broadcast %cst_18 : f32 to vector<8x128xf32>
      %53 = arith.select %40, %51, %52 : vector<8x128xi1>, vector<8x128xf32>
      %c0_19 = arith.constant 0 : index
      %c0_20 = arith.constant 0 : index
      %54 = vector.load %arg10[%c0_19, %c0_20] : memref<8x1xf32, #tpu.memory_space<vmem>>, vector<8x1xf32>
      %cst_21 = arith.constant dense<0.000000e+00> : vector<8xf32>
      %55 = vector.multi_reduction <add>, %53, %cst_21 [1] : vector<8x128xf32> to vector<8xf32>
      %56 = vector.shape_cast %55 : vector<8xf32> to vector<8x1xf32>
      %57 = arith.addf %54, %56 : vector<8x1xf32>
      %c0_22 = arith.constant 0 : index
      %c0_23 = arith.constant 0 : index
      %58 = vector.load %arg10[%c0_22, %c0_23] : memref<8x1xf32, #tpu.memory_space<vmem>>, vector<8x1xf32>
      tpu.vector_store %arg10[%c0_22, %c0_23], %57 {strides = array<i32>} : memref<8x1xf32, #tpu.memory_space<vmem>>, vector<8x1xf32>,
      %c0_24 = arith.constant 0 : index
      %c0_25 = arith.constant 0 : index
      %59 = vector.load %arg11[%c0_24, %c0_25] : memref<8x1xf32, #tpu.memory_space<vmem>>, vector<8x1xf32>
      %cst_26 = arith.constant 1.000000e+00 : f32
      %cst_27 = arith.constant 0.000000e+00 : f32
      %60 = vector.broadcast %cst_26 : f32 to vector<8x128xf32>
      %61 = vector.broadcast %cst_27 : f32 to vector<8x128xf32>
      %62 = arith.select %40, %60, %61 : vector<8x128xi1>, vector<8x128xf32>
      %cst_28 = arith.constant dense<0.000000e+00> : vector<8xf32>
      %63 = vector.multi_reduction <add>, %62, %cst_28 [1] : vector<8x128xf32> to vector<8xf32>
      %64 = vector.shape_cast %63 : vector<8xf32> to vector<8x1xf32>
      %65 = arith.addf %59, %64 : vector<8x1xf32>
      %c0_29 = arith.constant 0 : index
      %c0_30 = arith.constant 0 : index
      %66 = vector.load %arg11[%c0_29, %c0_30] : memref<8x1xf32, #tpu.memory_space<vmem>>, vector<8x1xf32>
      tpu.vector_store %arg11[%c0_29, %c0_30], %65 {strides = array<i32>} : memref<8x1xf32, #tpu.memory_space<vmem>>, vector<8x1xf32>,
    } else {
    }
    %c1_i32_8 = arith.constant 1 : i32
    %22 = arith.cmpi eq, %arg1, %c1_i32_8 : i32
    %c1_i32_9 = arith.constant 1 : i32
    %23 = arith.cmpi eq, %arg2, %c1_i32_9 : i32
    %24 = arith.andi %22, %23 : i1
    %25 = arith.extui %24 : i1 to i32
    %c0_i32_10 = arith.constant 0 : i32
    %26 = arith.cmpi ne, %25, %c0_i32_10 : i32
    scf.if %26 {
      %c0_11 = arith.constant 0 : index
      %c0_12 = arith.constant 0 : index
      %27 = vector.load %arg10[%c0_11, %c0_12] : memref<8x1xf32, #tpu.memory_space<vmem>>, vector<8x1xf32>
      %c0_13 = arith.constant 0 : index
      %c0_14 = arith.constant 0 : index
      %28 = vector.load %arg11[%c0_13, %c0_14] : memref<8x1xf32, #tpu.memory_space<vmem>>, vector<8x1xf32>
      %cst = arith.constant 1.000000e+00 : f32
      %29 = vector.broadcast %cst : f32 to vector<8x1xf32>
      %30 = arith.maximumf %28, %29 : vector<8x1xf32>
      %31 = arith.divf %27, %30 : vector<8x1xf32>
      %32 = vector.shape_cast %31 : vector<8x1xf32> to vector<8x1xf32>
      %33 = vector.broadcast %32 : vector<8x1xf32> to vector<8x128xf32>
      %c0_15 = arith.constant 0 : index
      %c0_16 = arith.constant 0 : index
      %34 = vector.load %arg7[%c0_15, %c0_16] : memref<8x128xf32, #tpu.memory_space<vmem>>, vector<8x128xf32>
      tpu.vector_store %arg7[%c0_15, %c0_16], %33 {strides = array<i32>} : memref<8x128xf32, #tpu.memory_space<vmem>>, vector<8x128xf32>,
    } else {
    }
    return
  }
  func.func @transform_0(%arg0: i32, %arg1: i32, %arg2: i32) -> (i32, i32) {
    %c0_i32 = arith.constant 0 : i32
    %c0_i32_0 = arith.constant 0 : i32
    return %arg0, %c0_i32 : i32, i32
  }
  func.func @transform_1(%arg0: i32, %arg1: i32, %arg2: i32) -> (i32, i32) {
    %c1_i32 = arith.constant 1 : i32
    %0 = arith.subi %c1_i32, %arg1 : i32
    %1 = arith.muli %arg2, %0 : i32
    %c1_i32_0 = arith.constant 1 : i32
    %2 = arith.muli %c1_i32_0, %arg1 : i32
    %3 = arith.addi %1, %2 : i32
    %c0_i32 = arith.constant 0 : i32
    %c0_i32_1 = arith.constant 0 : i32
    return %3, %c0_i32 : i32, i32
  }
  func.func @transform_2(%arg0: i32, %arg1: i32, %arg2: i32) -> (i32, i32) {
    %c0_i32 = arith.constant 0 : i32
    %c0_i32_0 = arith.constant 0 : i32
    return %arg0, %c0_i32 : i32, i32
  }
  func.func @transform_3(%arg0: i32, %arg1: i32, %arg2: i32) -> (i32, i32) {
    %c0_i32 = arith.constant 0 : i32
    %c0_i32_0 = arith.constant 0 : i32
    return %c0_i32, %arg2 : i32, i32
  }
  func.func @transform_4(%arg0: i32, %arg1: i32, %arg2: i32) -> (i32, i32) {
    %c0_i32 = arith.constant 0 : i32
    %c0_i32_0 = arith.constant 0 : i32
    return %arg0, %c0_i32 : i32, i32
  }
}

</mosaic_0001>

<llo_original>
// kernel: tpu_custom_call.1
$region0: #{tpu_custom_call.1}
  #allocation0 [shape = 'u32[]', space=smem, size = 0x4, offset = 0x4, fixed_abs, tag = 'smem constant byte address 0x4 - core index']
  #allocation1 [shape = 'u32[72,128]{1,0:T(1,128)}', space=vmem, size = 0x9000, scoped, tag = 'internal scratch']
  #allocation2 [shape = 'f32[8,1]{1,0:T(8,128)}', space=vmem, size = 0x1000, scoped, tag = 'scratch operand']
  #allocation3 [shape = 'f32[8,1]{1,0:T(8,128)}', space=vmem, size = 0x1000, scoped, tag = 'scratch operand']
  #allocation4 [shape = 'f32[8,1]{1,0:T(8,128)}', space=vmem, size = 0x1000, scoped, tag = 'scratch operand']
  #allocation5 [shape = 'f32[8,1]{1,0:T(8,128)}', space=vmem, size = 0x1000, scoped, tag = 'scratch operand']
  #allocation6 [shape = 'f32[2,8,128]{2,1,0:T(8,128)}', space=vmem, size = 0x2000, scoped, tag = 'scratch operand']
  %s0 = inlined_call_operand.vmem [shape: f32[16,128], index: 0, kind: input, shape index: {}]
  %s1 = inlined_call_operand.hbm [shape: f32[256,128], index: 1, kind: input, shape index: {}]
  %s2 = inlined_call_operand.vmem [shape: s32[16,1], index: 2, kind: input, shape index: {}]
  %s3 = inlined_call_operand.hbm [shape: s32[1,256], index: 3, kind: input, shape index: {}]
  %s4 = inlined_call_operand.hbm [shape: f32[16,128], index: 4, kind: output, shape index: {}]
  %s5 = sld [smem:[#allocation0]]
  $region73: #{tpu_custom_call.1} parent=0
    _
  %s7 = ssub.s32 1, %s5
  %s8 = scalar_select 0, %s7, %s5
  $region1: #{tpu_custom_call.1} parent=0
    #allocation7 [shape = 'u8[131072]{0}', space=vmem, size = 0x20000, scoped, tag = 'input window, operand 1']
    #allocation8 [shape = 's32[2]{0}', space=sflag, size = 0x8, scoped, tag = 'scoped memory for tpu_custom_call.1']
    #allocation9 [shape = 's32[2]{0}', space=sflag, size = 0x8, scoped, tag = 'scoped memory for tpu_custom_call.1']
    #allocation10 [shape = 'u8[1024]{0}', space=vmem, size = 0x400, scoped, tag = 'input window, operand 3']
    #allocation11 [shape = 's32[2]{0}', space=sflag, size = 0x8, scoped, tag = 'scoped memory for tpu_custom_call.1']
    #allocation12 [shape = 'u8[8192]{0}', space=vmem, size = 0x2000, scoped, tag = 'output window, operand 0']
    %9 = vsyncpa [#allocation8], 0
    %s10 = scalar_lea.sflag [#allocation8], 1
    %11 = vsyncpa %s10, 0
    %12 = vsyncpa [#allocation11], 0
    %s13 = scalar_lea.sflag [#allocation11], 1
    %14 = vsyncpa %s13, 0
    %15 = vsyncpa [#allocation9], 0
    %s16 = scalar_lea.sflag [#allocation9], 1
    %17 = vsyncpa %s16, 0
    loop: start=0, step=1, limit=10
    $region2: #{tpu_custom_call.1} parent=1 // loop_pre_header
      _
    $region3: #{tpu_custom_call.1} parent=1 // loop_header
      %s19 = sphi 0, %s23
      %p20 = scmp.ge.s32.totalorder %s19, 10
      %s26 = sphi 0, %s45
      %s27 = sphi 0, %s41
      %s28 = sphi 0, %s37
      %s29 = sphi 0, %s26
      %s30 = sphi 0, %s27
      %s31 = sphi 0, %s28
      %s32 = sphi 0, %s29
      %s33 = sphi 0, %s30
      %s34 = sphi 0, %s31
      %s48 = sphi 0, %s50
      %s51 = sphi 0, %s48
      %s52 = sphi 0, %s51
      %s68 = sphi 0, %s52
      %s80 = sphi 0, %s82
      %s83 = sphi 0, %s80
      %s84 = sphi 0, %s83
      %s100 = sphi 0, %s84
      %s106 = sphi 0, %s108
      %s109 = sphi 0, %s106
      %s110 = sphi 0, %s109
      %s126 = sphi 0, %s110
      %s132 = sphi 0, %s134
      %s135 = sphi 0, %s132
      %s136 = sphi 0, %s135
      %s152 = sphi 0, %s136
      %s158 = sphi 0, %s160
      %s161 = sphi 0, %s158
      %s162 = sphi 0, %s161
      %s178 = sphi 0, %s162
    $region4: #{tpu_custom_call.1} parent=1 // loop_header_branch
      %22 = sbr.rel (%p20) target = $region8
    $region5: #{tpu_custom_call.1} parent=1 // loop_body
      %s24 = ssub.s32 %s19, 1
      %s25 = ssub.s32 %s19, 2
      %s35 = sadd.s32 1, %s28
      %p36 = scmp.ge.s32.totalorder %s35, 2
      %s37 = scalar_select %p36, 0, %s35
      %s38 = sadd.s32 1, %s27
      %s39 = scalar_select %p36, %s38, %s27
      %p40 = scmp.ge.s32.totalorder %s39, 2
      %s41 = scalar_select %p40, 0, %s39
      %s42 = sadd.s32 1, %s26
      %s43 = scalar_select %p40, %s42, %s26
      %p44 = scmp.ge.s32.totalorder %s43, 2
      %s45 = scalar_select %p44, 0, %s43
      %s46 = ssub.s32 %s26, %s45
      %p47 = scmp.eq.s32.totalorder %s46, 0
      %s49 = sadd.s32 %s48, 1
      %s50 = scalar_select %p47, %s48, %s49
      %p53 = pneg %p47
      %p54 = scmp.eq.s32.totalorder %s19, 7
      %p55 = por %p53, %p54
      %p56 = scmp.ne.s32.totalorder %s48, %s51
      %p57 = scmp.eq.s32.totalorder %s19, 0
      %p58 = por %p56, %p57
      %p59 = scmp.ne.s32.totalorder %s48, %s51
      %p60 = scmp.eq.s32.totalorder %s24, 7
      %p61 = por %p59, %p60
      %p62 = scmp.ne.s32.totalorder %s51, %s52
      %p63 = scmp.eq.s32.totalorder %s24, 0
      %p64 = por %p62, %p63
      %p65 = scmp.ne.s32.totalorder %s51, %s52
      %p66 = scmp.eq.s32.totalorder %s25, 7
      %p67 = por %p65, %p66
      %p69 = scmp.ne.s32.totalorder %s52, %s68
      %p70 = scmp.eq.s32.totalorder %s25, 0
      %p71 = por %p69, %p70
      %s72 = ssub.s32 1, %s27
      %s73 = smul.u32 %s28, %s72
      %s74 = sadd.s32 %s73, %s27
      %s75 = ssub.s32 1, %s41
      %s76 = smul.u32 %s37, %s75
      %s77 = sadd.s32 %s76, %s41
      %s78 = ssub.s32 %s74, %s77
      %p79 = scmp.eq.s32.totalorder %s78, 0
      %s81 = sadd.s32 %s80, 1
      %s82 = scalar_select %p79, %s80, %s81
      %p85 = pneg %p79
      %p86 = scmp.eq.s32.totalorder %s19, 7
      %p87 = por %p85, %p86
      %p88 = scmp.ne.s32.totalorder %s80, %s83
      %p89 = scmp.eq.s32.totalorder %s19, 0
      %p90 = por %p88, %p89
      %p91 = scmp.ne.s32.totalorder %s80, %s83
      %p92 = scmp.eq.s32.totalorder %s24, 7
      %p93 = por %p91, %p92
      %p94 = scmp.ne.s32.totalorder %s83, %s84
      %p95 = scmp.eq.s32.totalorder %s24, 0
      %p96 = por %p94, %p95
      %p97 = scmp.ne.s32.totalorder %s83, %s84
      %p98 = scmp.eq.s32.totalorder %s25, 7
      %p99 = por %p97, %p98
      %p101 = scmp.ne.s32.totalorder %s84, %s100
      %p102 = scmp.eq.s32.totalorder %s25, 0
      %p103 = por %p101, %p102
      %s104 = ssub.s32 %s26, %s45
      %p105 = scmp.eq.s32.totalorder %s104, 0
      %s107 = sadd.s32 %s106, 1
      %s108 = scalar_select %p105, %s106, %s107
      %p111 = pneg %p105
      %p112 = scmp.eq.s32.totalorder %s19, 7
      %p113 = por %p111, %p112
      %p114 = scmp.ne.s32.totalorder %s106, %s109
      %p115 = scmp.eq.s32.totalorder %s19, 0
      %p116 = por %p114, %p115
      %p117 = scmp.ne.s32.totalorder %s106, %s109
      %p118 = scmp.eq.s32.totalorder %s24, 7
      %p119 = por %p117, %p118
      %p120 = scmp.ne.s32.totalorder %s109, %s110
      %p121 = scmp.eq.s32.totalorder %s24, 0
      %p122 = por %p120, %p121
      %p123 = scmp.ne.s32.totalorder %s109, %s110
      %p124 = scmp.eq.s32.totalorder %s25, 7
      %p125 = por %p123, %p124
      %p127 = scmp.ne.s32.totalorder %s110, %s126
      %p128 = scmp.eq.s32.totalorder %s25, 0
      %p129 = por %p127, %p128
      %s130 = ssub.s32 %s28, %s37
      %p131 = scmp.eq.s32.totalorder %s130, 0
      %s133 = sadd.s32 %s132, 1
      %s134 = scalar_select %p131, %s132, %s133
      %p137 = pneg %p131
      %p138 = scmp.eq.s32.totalorder %s19, 7
      %p139 = por %p137, %p138
      %p140 = scmp.ne.s32.totalorder %s132, %s135
      %p141 = scmp.eq.s32.totalorder %s19, 0
      %p142 = por %p140, %p141
      %p143 = scmp.ne.s32.totalorder %s132, %s135
      %p144 = scmp.eq.s32.totalorder %s24, 7
      %p145 = por %p143, %p144
      %p146 = scmp.ne.s32.totalorder %s135, %s136
      %p147 = scmp.eq.s32.totalorder %s24, 0
      %p148 = por %p146, %p147
      %p149 = scmp.ne.s32.totalorder %s135, %s136
      %p150 = scmp.eq.s32.totalorder %s25, 7
      %p151 = por %p149, %p150
      %p153 = scmp.ne.s32.totalorder %s136, %s152
      %p154 = scmp.eq.s32.totalorder %s25, 0
      %p155 = por %p153, %p154
      %s156 = ssub.s32 %s26, %s45
      %p157 = scmp.eq.s32.totalorder %s156, 0
      %s159 = sadd.s32 %s158, 1
      %s160 = scalar_select %p157, %s158, %s159
      %p163 = pneg %p157
      %p164 = scmp.eq.s32.totalorder %s19, 7
      %p165 = por %p163, %p164
      %p166 = scmp.ne.s32.totalorder %s158, %s161
      %p167 = scmp.eq.s32.totalorder %s19, 0
      %p168 = por %p166, %p167
      %p169 = scmp.ne.s32.totalorder %s158, %s161
      %p170 = scmp.eq.s32.totalorder %s24, 7
      %p171 = por %p169, %p170
      %p172 = scmp.ne.s32.totalorder %s161, %s162
      %p173 = scmp.eq.s32.totalorder %s24, 0
      %p174 = por %p172, %p173
      %p175 = scmp.ne.s32.totalorder %s161, %s162
      %p176 = scmp.eq.s32.totalorder %s25, 7
      %p177 = por %p175, %p176
      %p179 = scmp.ne.s32.totalorder %s162, %s178
      %p180 = scmp.eq.s32.totalorder %s25, 0
      %p181 = por %p179, %p180
      %p182 = scmp.le.s32.totalorder 1, %s19
      %p183 = scmp.lt.s32.totalorder %s19, 9
      %p184 = pnand %p182, %p183
      %p185 = pneg %p184
      // Predicated region
      $region9: #{tpu_custom_call.1} parent=5 // pred_check
        _
      $region10: #{tpu_custom_call.1} parent=5 // pred_check_branch
        %187 = sbr.rel (%p184) target = $region12
      $region11: #{tpu_custom_call.1} parent=5 // pred_region
        %s188 = ssub.s32 %s19, 1
      $region12: #{tpu_custom_call.1} parent=5 // pred_fallthru
        _
      %p189 = scmp.lt.s32.totalorder %s19, 8
      // Predicated region
      $region13: #{tpu_custom_call.1} parent=5 // pred_check
        %p190 = pneg %p189
      $region14: #{tpu_custom_call.1} parent=5 // pred_check_branch
        %192 = sbr.rel (%p190) target = $region16
      $region15: #{tpu_custom_call.1} parent=5 // pred_region
        // Predicated region
        $region17: #{tpu_custom_call.1} parent=15 // pred_check
          %p193 = pneg %p58
        $region18: #{tpu_custom_call.1} parent=15 // pred_check_branch
          %195 = sbr.rel (%p193) target = $region20
        $region19: #{tpu_custom_call.1} parent=15 // pred_region
          %p196 = scmp.lt.s32.totalorder %s26, 1
          %s197 = scalar_select %p196, %s26, 1
          %s198 = smul.addr %s197, 8
          %s199 = scalar_lea.vmem %s0, %s198
        $region20: #{tpu_custom_call.1} parent=15 // pred_fallthru
          _
        // Predicated region
        $region21: #{tpu_custom_call.1} parent=15 // pred_check
          %p200 = pneg %p90
        $region22: #{tpu_custom_call.1} parent=15 // pred_check_branch
          %202 = sbr.rel (%p200) target = $region24
        $region23: #{tpu_custom_call.1} parent=15 // pred_region
          %s203 = sand.u32 %s80, 1
          %s204 = scalar_lea.sflag [#allocation8], %s203
          %s205 = sand.u32 %s80, 1
          %s206 = smul.addr %s205, 128
          %s207 = scalar_lea.vmem [#allocation7], %s206
          %s208 = ssub.s32 1, %s27
          %s209 = smul.u32 %s28, %s208
          %s210 = sadd.s32 %s209, %s27
          %s211 = smul.u32 16, %s210
          %213 = vsyncadd %s204, 0
          %s214 = smul.addr %s211, 8
          %s215 = scalar_lea.hbm %s1, %s214
          %s216 = sshll.u32 %s215, 4
          %s217 = int_to_ptr.hbm [resolvable:$true] %s216
          %s218 = sshll.u32 %s207, 4
          %s219 = int_to_ptr.vmem [resolvable:$true] %s218
          %224 = dma.hbm_to_vmem [thread:$0]  %s217, 2048, %s219, %s204, 128, 128, 8
        $region24: #{tpu_custom_call.1} parent=15 // pred_fallthru
          _
        // Predicated region
        $region25: #{tpu_custom_call.1} parent=15 // pred_check
          %p225 = pneg %p116
        $region26: #{tpu_custom_call.1} parent=15 // pred_check_branch
          %227 = sbr.rel (%p225) target = $region28
        $region27: #{tpu_custom_call.1} parent=15 // pred_region
          %p228 = scmp.lt.s32.totalorder %s26, 1
          %s229 = scalar_select %p228, %s26, 1
          %s230 = smul.addr %s229, 8
          %s231 = scalar_lea.vmem %s2, %s230
        $region28: #{tpu_custom_call.1} parent=15 // pred_fallthru
          _
        // Predicated region
        $region29: #{tpu_custom_call.1} parent=15 // pred_check
          %p232 = pneg %p142
        $region30: #{tpu_custom_call.1} parent=15 // pred_check_branch
          %234 = sbr.rel (%p232) target = $region32
        $region31: #{tpu_custom_call.1} parent=15 // pred_region
          %s235 = sand.u32 %s132, 1
          %s236 = scalar_lea.sflag [#allocation11], %s235
          %s237 = sand.u32 %s132, 1
          %s238 = scalar_lea.vmem [#allocation10], %s237
          %240 = vsyncadd %s236, 0
          %s241 = scalar_lea.hbm %s3, %s28
          %s243 = sshll.u32 %s241, 4
          %s244 = int_to_ptr.hbm [resolvable:$true] %s243
          %s245 = sshll.u32 %s238, 4
          %s246 = int_to_ptr.vmem [resolvable:$true] %s245
          %248 = dma.hbm_to_vmem [thread:$0]  %s244, 16, %s246, %s236
        $region32: #{tpu_custom_call.1} parent=15 // pred_fallthru
          _
      $region16: #{tpu_custom_call.1} parent=5 // pred_fallthru
        _
      %p249 = scmp.le.s32.totalorder 1, %s19
      %p250 = scmp.lt.s32.totalorder %s19, 9
      %p251 = pnand %p249, %p250
      %p252 = pneg %p251
      // Predicated region
      $region33: #{tpu_custom_call.1} parent=5 // pred_check
        _
      $region34: #{tpu_custom_call.1} parent=5 // pred_check_branch
        %254 = sbr.rel (%p251) target = $region36
      $region35: #{tpu_custom_call.1} parent=5 // pred_region
        %s255 = ssub.s32 %s19, 1
        %s256 = sand.u32 %s83, 1
        %s257 = scalar_lea.sflag [#allocation8], %s256
        %s258 = sand.u32 %s83, 1
        %s259 = smul.addr %s258, 128
        %s260 = scalar_lea.vmem [#allocation7], %s259
        // Predicated region
        $region37: #{tpu_custom_call.1} parent=35 // pred_check
          %p261 = pneg %p96
        $region38: #{tpu_custom_call.1} parent=35 // pred_check_branch
          %263 = sbr.rel (%p261) target = $region40
        $region39: #{tpu_custom_call.1} parent=35 // pred_region
          %265 = dma.done %s257, 2048
        $region40: #{tpu_custom_call.1} parent=35 // pred_fallthru
          _
        %s266 = sand.u32 %s135, 1
        %s267 = scalar_lea.sflag [#allocation11], %s266
        %s268 = sand.u32 %s135, 1
        %s269 = scalar_lea.vmem [#allocation10], %s268
        // Predicated region
        $region41: #{tpu_custom_call.1} parent=35 // pred_check
          %p270 = pneg %p148
        $region42: #{tpu_custom_call.1} parent=35 // pred_check_branch
          %272 = sbr.rel (%p270) target = $region44
        $region43: #{tpu_custom_call.1} parent=35 // pred_region
          %274 = dma.done %s267, 16
        $region44: #{tpu_custom_call.1} parent=35 // pred_fallthru
          _
        %p275 = scmp.lt.s32.totalorder %s29, 1
        %s276 = scalar_select %p275, %s29, 1
        %s277 = smul.addr %s276, 8
        %s278 = scalar_lea.vmem %s0, %s277
        %p279 = pneg %p64
        %p280 = pneg %p61
        %s281 = sand.u32 %s83, 1
        %s282 = scalar_lea.sflag [#allocation8], %s281
        %s283 = sand.u32 %s83, 1
        %s284 = smul.addr %s283, 128
        %s285 = scalar_lea.vmem [#allocation7], %s284
        %p286 = pneg %p96
        %p287 = pneg %p93
        %p288 = scmp.lt.s32.totalorder %s29, 1
        %s289 = scalar_select %p288, %s29, 1
        %s290 = smul.addr %s289, 8
        %s291 = scalar_lea.vmem %s2, %s290
        %p292 = pneg %p122
        %p293 = pneg %p119
        %s294 = sand.u32 %s135, 1
        %s295 = scalar_lea.sflag [#allocation11], %s294
        %s296 = sand.u32 %s135, 1
        %s297 = scalar_lea.vmem [#allocation10], %s296
        %p298 = pneg %p148
        %p299 = pneg %p145
        %p300 = pneg %p174
        %p301 = pneg %p171
        %s302 = sand.u32 %s161, 1
        %s303 = scalar_lea.sflag [#allocation9], %s302
        %s304 = sand.u32 %s161, 1
        %s305 = smul.addr %s304, 8
        %s306 = scalar_lea.vmem [#allocation12], %s305
        %p307 = scmp.lt.s32.totalorder %s29, 1
        %s308 = scalar_select %p307, %s29, 1
        %s309 = smul.addr %s308, 8
        %s310 = scalar_lea.vmem %s0, %s309
        %s311 = ssub.s32 1, %s30
        %s312 = smul.u32 %s31, %s311
        %s313 = sadd.s32 %s312, %s30
        %s314 = smul.u32 16, %s313
        %p315 = scmp.lt.s32.totalorder %s29, 1
        %s316 = scalar_select %p315, %s29, 1
        %s317 = smul.addr %s316, 8
        %s318 = scalar_lea.vmem %s2, %s317
        %v319 = vlaneseq
        %v320 = vand.u32 %v319, 127
        %s321 = smul.u32 %s31, 128
        %v322 = vstv %s321
        %v323 = vadd.s32 %v320, %v322
        %vm324 = vcmp.lt.s32.totalorder %v323, 256
        %v325 = vld [vmem:[%s318] sm:$0xff]
        %v326 = vld [vmem:[%s269] sm:$0x1]
        %327 = vset.pattern.permute.xlu0 0
        %328 = vperm.xlu0 %327, %v325
        %v329 = vpop.permute.xlu0 %328
        %v330 = vperm.slane %v326, 0
        %vm331 = vcmp.eq.s32.totalorder %v329, %v330
        %p332 = scmp.eq.s32.totalorder %s30, 0
        %p333 = scmp.eq.s32.totalorder %s31, 0
        %p334 = pnand %p332, %p333
        %p335 = pneg %p334
        // Predicated region
        $region45: #{tpu_custom_call.1} parent=35 // pred_check
          _
        $region46: #{tpu_custom_call.1} parent=35 // pred_check_branch
          %337 = sbr.rel (%p334) target = $region48
        $region47: #{tpu_custom_call.1} parent=35 // pred_region
          %vm338 = vcmask 7168
          %339 = vst.msk [vmem:[#allocation2] sm:$0xff] %vm338, -1e+30
          %340 = vst.msk [vmem:[#allocation3] sm:$0xff] %vm338, 0.0
          %341 = vst.msk [vmem:[#allocation4] sm:$0xff] %vm338, 0.0
          %342 = vst.msk [vmem:[#allocation5] sm:$0xff] %vm338, 0.0
        $region48: #{tpu_custom_call.1} parent=35 // pred_fallthru
          _
        // Predicated region
        $region49: #{tpu_custom_call.1} parent=35 // pred_check
          %p343 = pneg %p332
        $region50: #{tpu_custom_call.1} parent=35 // pred_check_branch
          %345 = sbr.rel (%p343) target = $region52
        $region51: #{tpu_custom_call.1} parent=35 // pred_region
          %v346 = vld [vmem:[%s310] sm:$0xff]
          %v347 = vld [vmem:[%s260] sm:$0xff]
          %v348 = vld [vmem:[%s260 + $0x8] sm:$0xff]
          %v349 = vld [vmem:[%s260 + $0x10] sm:$0xff]
          %v350 = vld [vmem:[%s260 + $0x18] sm:$0xff]
          %v351 = vld [vmem:[%s260 + $0x20] sm:$0xff]
          %v352 = vld [vmem:[%s260 + $0x28] sm:$0xff]
          %v353 = vld [vmem:[%s260 + $0x30] sm:$0xff]
          %v354 = vld [vmem:[%s260 + $0x38] sm:$0xff]
          %v355 = vld [vmem:[%s260 + $0x40] sm:$0xff]
          %v356 = vld [vmem:[%s260 + $0x48] sm:$0xff]
          %v357 = vld [vmem:[%s260 + $0x50] sm:$0xff]
          %v358 = vld [vmem:[%s260 + $0x58] sm:$0xff]
          %v359 = vld [vmem:[%s260 + $0x60] sm:$0xff]
          %v360 = vld [vmem:[%s260 + $0x68] sm:$0xff]
          %v361 = vld [vmem:[%s260 + $0x70] sm:$0xff]
          %v362 = vld [vmem:[%s260 + $0x78] sm:$0xff]
          %363 = vmatpush.xpose.msra.mxu0 %v362
          %364 = vmatpush.xpose.msra.mxu0 %v361
          %365 = vmatpush.xpose.msra.mxu0 %v360
          %366 = vmatpush.xpose.msra.mxu0 %v359
          %367 = vmatpush.xpose.msra.mxu0 %v358
          %368 = vmatpush.xpose.msra.mxu0 %v357
          %369 = vmatpush.xpose.msra.mxu0 %v356
          %370 = vmatpush.xpose.msra.mxu0 %v355
          %371 = vmatpush.xpose.msra.mxu0 %v354
          %372 = vmatpush.xpose.msra.mxu0 %v353
          %373 = vmatpush.xpose.msra.mxu0 %v352
          %374 = vmatpush.xpose.msra.mxu0 %v351
          %375 = vmatpush.xpose.msra.mxu0 %v350
          %376 = vmatpush.xpose.msra.mxu0 %v349
          %377 = vmatpush.xpose.msra.mxu0 %v348
          %378 = vmatpush.xpose.msra.mxu0 %v347
          %379 = vmatmul.f32.gmra.mxu0 %v346
          %v380 = vpop.f32.mrf.mxu0
          %v381 = vadd.f32 0.0, %v380
          %382 = vdwg.mxu0
          %s383 = smul.u32 %s31, 8
          %s384 = scalar_lea.vmem [#allocation6], %s383
          %385 = vst [vmem:[%s384] sm:$0xff] %v381
          %v386 = vsel %vm324, %v381, -1e+30
          %v387 = vld [vmem:[#allocation2] sm:$0xff]
          %388 = vmax.xlane.f32.xlu0 %v386
          %v389 = vpop.xlane.xlu0 %388
          %v390 = vmax.f32 %v387, %v389
          %v391 = vsub.f32 %v387, %v390
          %v392 = vmul.f32 %v391, 1.442695
          %v393 = vpow.pop %v392
          %395 = vset.pattern.permute.xlu0 0
          %396 = vperm.xlu0 %395, %v390
          %v397 = vpop.permute.xlu0 %396
          %v399 = vsub.f32 %v386, %v397
          %v400 = vmul.f32 %v399, 1.442695
          %v401 = vpow.pop %v400
          %vm402 = vmxor %vm331, 1
          %vm403 = vmand %vm324, %vm402
          %v404 = vld [vmem:[#allocation3] sm:$0xff]
          %v405 = vmul.f32 %v393, %v404
          %v406 = vsel %vm403, %v401, 0.0
          %407 = vadd.xlane.f32.xlu0 %v406
          %v408 = vpop.xlane.xlu0 %407
          %v409 = vadd.f32 %v405, %v408
          %vm410 = vcmask 7168
          %411 = vst.msk [vmem:[#allocation3] sm:$0xff] %vm410, %v409
          %412 = vst.msk [vmem:[#allocation2] sm:$0xff] %vm410, %v390
        $region52: #{tpu_custom_call.1} parent=35 // pred_fallthru
          _
        %p413 = scmp.eq.s32.totalorder %s30, 1
        // Predicated region
        $region53: #{tpu_custom_call.1} parent=35 // pred_check
          %p414 = pneg %p413
        $region54: #{tpu_custom_call.1} parent=35 // pred_check_branch
          %416 = sbr.rel (%p414) target = $region56
        $region55: #{tpu_custom_call.1} parent=35 // pred_region
          %s417 = smul.u32 %s31, 8
          %s418 = scalar_lea.vmem [#allocation6], %s417
          %v419 = vld [vmem:[%s418] sm:$0xff]
          %v420 = vlaneseq
          %v421 = vshrl.u32 %v420, 7
          %s422 = smul.u32 %s29, 8
          %v423 = vstv %s422
          %v424 = vadd.s32 %v421, %v423
          %vm425 = vcmp.eq.s32.totalorder %v424, %v323
          %vm426 = vcmp.lt.s32.totalorder %v323, 16
          %vm427 = vmand %vm425, %vm426
          %vm428 = vmxor %vm427, 1
          %vm429 = vmand %vm331, %vm428
          %vm430 = vmand %vm429, %vm324
          %v431 = vld [vmem:[#allocation2] sm:$0xff]
          %433 = vset.pattern.permute.xlu0 0
          %434 = vperm.xlu0 %433, %v431
          %v435 = vpop.permute.xlu0 %434
          %v437 = vsub.f32 %v419, %v435
          %v438 = vmul.f32 %v437, 1.442695
          %v439 = vpow.pop %v438
          %v440 = vld [vmem:[#allocation3] sm:$0xff]
          %v441 = vadd.f32 %v440, 1e-06
          %443 = vset.pattern.permute.xlu0 0
          %444 = vperm.xlu0 %443, %v441
          %v445 = vpop.permute.xlu0 %444
          %v447 = vadd.f32 %v439, %v445
          %v448 = vlog2.pop %v447
          %v449 = vmul.f32 %v448, 0.6931472
          %v450 = vsub.f32 %v437, %v449
          %v451 = vsel %vm430, %v450, 0.0
          %v452 = vld [vmem:[#allocation4] sm:$0xff]
          %453 = vadd.xlane.f32.xlu0 %v451
          %v454 = vpop.xlane.xlu0 %453
          %v455 = vadd.f32 %v452, %v454
          %vm456 = vcmask 7168
          %457 = vst.msk [vmem:[#allocation4] sm:$0xff] %vm456, %v455
          %v458 = vld [vmem:[#allocation5] sm:$0xff]
          %v459 = vsel %vm430, 1.0, 0.0
          %460 = vadd.xlane.f32.xlu0 %v459
          %v461 = vpop.xlane.xlu0 %460
          %v462 = vadd.f32 %v458, %v461
          %463 = vst.msk [vmem:[#allocation5] sm:$0xff] %vm456, %v462
        $region56: #{tpu_custom_call.1} parent=35 // pred_fallthru
          _
        %p464 = scmp.eq.s32.totalorder %s31, 1
        %p465 = pnand %p413, %p464
        %p466 = pneg %p465
        // Predicated region
        $region57: #{tpu_custom_call.1} parent=35 // pred_check
          _
        $region58: #{tpu_custom_call.1} parent=35 // pred_check_branch
          %468 = sbr.rel (%p465) target = $region60
        $region59: #{tpu_custom_call.1} parent=35 // pred_region
          %v469 = vld [vmem:[#allocation4] sm:$0xff]
          %v470 = vld [vmem:[#allocation5] sm:$0xff]
          %v471 = vmax.f32 %v470, 1.0
          %v472 = vrcp.pop %v471
          %v473 = vmul.f32 %v471, %v472
          %v474 = vsub.f32 1.0, %v473
          %v475 = vmul.f32 %v472, %v474
          %v476 = vadd.f32 %v472, %v475
          %vm477 = vweird.f32 %v471
          %vm478 = vweird.f32 %v472
          %vm479 = vmor %vm477, %vm478
          %v480 = vsel %vm479, %v472, %v476
          %v481 = vand.u32 2147483647, %v471
          %vm482 = vcmp.eq.f32.partialorder %v481, 8.507059e+37
          %v483 = vand.u32 %v471, 2147483648
          %v484 = vor.u32 1.1754944e-38, %v483
          %v485 = vsel %vm482, %v484, %v480
          %v486 = vmul.f32 %v469, %v485
          %488 = vset.pattern.permute.xlu0 0
          %489 = vperm.xlu0 %488, %v486
          %v490 = vpop.permute.xlu0 %489
          %492 = vst [vmem:[%s306] sm:$0xff] %v490
        $region60: #{tpu_custom_call.1} parent=35 // pred_fallthru
          _
        %s493 = sand.u32 %s161, 1
        %s494 = scalar_lea.sflag [#allocation9], %s493
        %s495 = sand.u32 %s161, 1
        %s496 = smul.addr %s495, 8
        %s497 = scalar_lea.vmem [#allocation12], %s496
        // Predicated region
        $region61: #{tpu_custom_call.1} parent=35 // pred_check
          %p498 = pneg %p171
        $region62: #{tpu_custom_call.1} parent=35 // pred_check_branch
          %500 = sbr.rel (%p498) target = $region64
        $region63: #{tpu_custom_call.1} parent=35 // pred_region
          %502 = vsyncadd %s494, 0
          %s503 = smul.addr %s29, 8
          %s504 = scalar_lea.hbm %s4, %s503
          %s506 = sshll.u32 %s497, 4
          %s507 = int_to_ptr.vmem [resolvable:$true] %s506
          %s508 = sshll.u32 %s504, 4
          %s509 = int_to_ptr.hbm [resolvable:$true] %s508
          %511 = dma.vmem_to_hbm [thread:$0]  %s507, 128, %s509, %s494
        $region64: #{tpu_custom_call.1} parent=35 // pred_fallthru
          _
      $region36: #{tpu_custom_call.1} parent=5 // pred_fallthru
        _
      %p512 = scmp.le.s32.totalorder 2, %s19
      // Predicated region
      $region65: #{tpu_custom_call.1} parent=5 // pred_check
        %p513 = pneg %p512
      $region66: #{tpu_custom_call.1} parent=5 // pred_check_branch
        %515 = sbr.rel (%p513) target = $region68
      $region67: #{tpu_custom_call.1} parent=5 // pred_region
        %s516 = ssub.s32 %s19, 2
        // Predicated region
        $region69: #{tpu_custom_call.1} parent=67 // pred_check
          %p517 = pneg %p177
        $region70: #{tpu_custom_call.1} parent=67 // pred_check_branch
          %519 = sbr.rel (%p517) target = $region72
        $region71: #{tpu_custom_call.1} parent=67 // pred_region
          %s520 = sand.u32 %s162, 1
          %s521 = scalar_lea.sflag [#allocation9], %s520
          %s522 = sand.u32 %s162, 1
          %s523 = smul.addr %s522, 8
          %s524 = scalar_lea.vmem [#allocation12], %s523
          %526 = dma.done %s521, 128
        $region72: #{tpu_custom_call.1} parent=67 // pred_fallthru
          _
      $region68: #{tpu_custom_call.1} parent=5 // pred_fallthru
        _
    $region6: #{tpu_custom_call.1} parent=1 // loop_footer
      %s23 = sadd.s32 1, %s19
    $region7: #{tpu_custom_call.1} parent=1 // loop_footer_branch
      %18 = sbr.rel target = $region3
    $region8: #{tpu_custom_call.1} parent=1 // loop_exit
      _
    %527 = vsyncpa [#allocation8], 1
    %s528 = scalar_lea.sflag [#allocation8], 1
    %529 = vsyncpa %s528, 1
    %530 = vsyncpa [#allocation11], 1
    %s531 = scalar_lea.sflag [#allocation11], 1
    %532 = vsyncpa %s531, 1
    %533 = vsyncpa [#allocation9], 1
    %s534 = scalar_lea.sflag [#allocation9], 1
    %535 = vsyncpa %s534, 1

</llo_original>
